<compile_context>
chip_gen: v5e
topology: v5e:2x2
jax: 0.10.0
libtpu: 0.0.40
codegen_flags: <defaults>
</compile_context>

<pallas_src>
import jax
import jax.numpy as jnp
from jax.experimental import pallas as pl
from jax.experimental.pallas import tpu as pltpu

BN_EPS = 1e-5

# MXU operand dtype (accumulation is always f32 via preferred_element_type).
# bf16 halves the footprint of A_hat / h and uses the native bf16 MXU path on
# v5e/v6e/v7x; flip to jnp.float32 for exact-f32 matmuls.
MXU_DTYPE = jnp.bfloat16


def _vmem():
    return pl.BlockSpec(memory_space=pltpu.MemorySpace.VMEM)


# --------------------------- fused Pallas kernel ------------------------------

def fused_causal_gcn_kernel(a_ref, x_ref, gscale_ref, gbeta_ref,
                            w0_ref, b0_ref, convw_ref, convb_ref,
                            wnd_ref, bnd_ref, pool_ref,
                            wc_ref, wo_ref, bcls_ref,
                            out_ref):
    """Whole CausalGCN forward: BN -> (L+1) GCN layers -> node attention ->
    global mean pool -> two classifier heads; one lane-dense output block."""
    a = a_ref[...].astype(MXU_DTYPE)                    # [N, N] normalized adjacency

    # --- layer 0: BatchNorm1d (eval) affine on X (single VPU FMA), then GCN.
    xb = x_ref[...] * gscale_ref[...] + gbeta_ref[...]
    xw = jnp.dot(xb.astype(MXU_DTYPE), w0_ref[...].astype(MXU_DTYPE),
                 preferred_element_type=jnp.float32)
    h = jnp.maximum(
        jnp.dot(a, xw.astype(MXU_DTYPE), preferred_element_type=jnp.float32)
        + b0_ref[...], 0.0)

    # --- remaining GCN layers: static unroll (layer count is a trace-time
    # constant from the stacked-weight shape); h stays in vregs/VMEM.
    for l in range(convw_ref.shape[0]):
        xw = jnp.dot(h.astype(MXU_DTYPE), convw_ref[l].astype(MXU_DTYPE),
                     preferred_element_type=jnp.float32)
        h = jnp.maximum(
            jnp.dot(a, xw.astype(MXU_DTYPE), preferred_element_type=jnp.float32)
            + convb_ref[l], 0.0)

    # --- node attention: softmax over 2 channels == [sigmoid(d), 1 - sigmoid(d)]
    # with d = logit_0 - logit_1 (no cross-lane max/sum; exp goes to the EUP).
    d = jnp.dot(h, wnd_ref[...], preferred_element_type=jnp.float32) + bnd_ref[...]
    att_c = 1.0 / (1.0 + jnp.exp(-d))                   # [N, 1], f32
    hc = att_c * h                                      # context-weighted nodes

    # --- global mean pool.  xo = (1 - att)*h, so pool@xo = pool@h - pool@xc:
    # two (Gp,N)x(N,H) dots, no lane-axis concat / extra elementwise pass.
    pool = pool_ref[...].astype(MXU_DTYPE)
    pooled_h = jnp.dot(pool, h.astype(MXU_DTYPE), preferred_element_type=jnp.float32)
    pooled_c = jnp.dot(pool, hc.astype(MXU_DTYPE), preferred_element_type=jnp.float32)
    pooled_o = pooled_h - pooled_c

    # --- classifier heads (BN pre-folded in the wrapper), lane-dense slabs;
    # single unmasked (Gp, 128) store.
    out_ref[...] = (
        jnp.dot(pooled_c.astype(MXU_DTYPE), wc_ref[...].astype(MXU_DTYPE),
                preferred_element_type=jnp.float32)
        + jnp.dot(pooled_o.astype(MXU_DTYPE), wo_ref[...].astype(MXU_DTYPE),
                  preferred_element_type=jnp.float32)
        + bcls_ref[...])


# --------------------------- JAX glue ------------------------------------------

def build_norm_adj(edge_index, num_nodes):
    """D^-1/2 (A + I) D^-1/2 as a dense [N, N] matrix."""
    row, col = edge_index
    a = jnp.zeros((num_nodes, num_nodes), jnp.float32)
    a = a.at[row, col].add(1.0)
    a = a + jnp.eye(num_nodes, dtype=jnp.float32)       # self loops
    deg = a.sum(axis=1)
    dinv = 1.0 / jnp.sqrt(jnp.maximum(deg, 1.0))
    return a * dinv[:, None] * dinv[None, :]


def build_pool_mat(batch, num_graphs, num_nodes):
    onehot = (batch[None, :] == jnp.arange(num_graphs)[:, None]).astype(jnp.float32)
    counts = jnp.maximum(onehot.sum(axis=1, keepdims=True), 1.0)
    return onehot / counts        # [num_graphs, num_nodes], rows sum to 1


def fold_bn_into_linear(gamma, beta, w, b):
    """Linear(BN_eval(x)) == x @ w' + b'.  Valid only when BN directly precedes
    the Linear with no nonlinearity in between (true for fc_context/fc_objects)."""
    scale = gamma / jnp.sqrt(1.0 + BN_EPS)
    return scale[:, None] * w, b + beta @ w


def causal_gcn_forward(params, x, edge_index, batch, num_graphs):
    n, f = x.shape
    hidden = params['conv_feat_w'].shape[1]
    num_classes = params['fc_c_w'].shape[1]

    # dense normalized adjacency, stored bf16 (the only O(N^2) tensor)
    a_hat = build_norm_adj(edge_index, n).astype(MXU_DTYPE)

    # bn_feat (eval) affine terms, applied to X inside the kernel
    gscale = (params['bn_feat_gamma'] / jnp.sqrt(1.0 + BN_EPS)).reshape(1, f)
    gbeta = params['bn_feat_beta'].reshape(1, f)

    # stacked hidden GCN layers
    conv_w = jnp.stack([w for (w, _) in params['convs']])                     # [L, H, H]
    conv_b = jnp.stack([b.reshape(1, hidden) for (_, b) in params['convs']])  # [L, 1, H]

    # closed-form 2-way node-attention softmax weights
    wn, bn = params['node_att_w'], params['node_att_b']
    wn_diff = (wn[:, 0] - wn[:, 1]).reshape(hidden, 1)
    bn_diff = (bn[0] - bn[1]).reshape(1, 1)

    # classifier heads (BN folded) as two lane-dense slabs feeding one 128-lane
    # output block: head-c fills columns [:C], head-o fills [C:2C].
    wc, bc = fold_bn_into_linear(params['fc_c_gamma'], params['fc_c_beta'],
                                 params['fc_c_w'], params['fc_c_b'])
    wo, bo = fold_bn_into_linear(params['fc_o_gamma'], params['fc_o_beta'],
                                 params['fc_o_w'], params['fc_o_b'])
    out_lanes = max(128, ((2 * num_classes + 127) // 128) * 128)
    wc_pad = jnp.zeros((hidden, out_lanes), jnp.float32).at[:, :num_classes].set(wc)
    wo_pad = jnp.zeros((hidden, out_lanes), jnp.float32) \
        .at[:, num_classes:2 * num_classes].set(wo)
    bcls = jnp.zeros((1, out_lanes), jnp.float32)
    bcls = bcls.at[0, :num_classes].set(bc)
    bcls = bcls.at[0, num_classes:2 * num_classes].set(bo)

    # pooling matrix, row-padded to a sublane multiple -> unmasked (Gp,128) store
    g_pad = ((num_graphs + 7) // 8) * 8
    pool = jnp.zeros((g_pad, n), jnp.float32)
    pool = pool.at[:num_graphs].set(build_pool_mat(batch, num_graphs, n))

    # NOTE: the reference forward also computes edge_att from edge_rep; it is
    # dead code (never feeds the returned logits) and is intentionally omitted.
    # NOTE: at realistic graph sizes, A_hat should be row-tiled with a grid
    # ("parallel" row axis for v7x's 2 TensorCores, "arbitrary" reduction)
    # instead of whole-array VMEM residency; at N=32 everything fits trivially.
    out = pl.pallas_call(
        fused_causal_gcn_kernel,
        out_shape=jax.ShapeDtypeStruct((g_pad, out_lanes), jnp.float32),
        in_specs=[_vmem()] * 14,
        out_specs=_vmem(),
        compiler_params=pltpu.CompilerParams(vmem_limit_bytes=32 * 1024 * 1024),
    )(a_hat, x, gscale, gbeta,
      params['conv_feat_w'], params['conv_feat_b'].reshape(1, hidden),
      conv_w, conv_b, wn_diff, bn_diff, pool, wc_pad, wo_pad, bcls)

    xc_logits = out[:num_graphs, :num_classes]
    xo_logits = out[:num_graphs, num_classes:2 * num_classes]
    return xc_logits, xo_logits


def init_params(key, num_features, hidden, num_classes, layers):
    n_keys = 10 + 2 * layers
    ks = list(jax.random.split(key, n_keys))

    def nrm(k, shape, scale=0.1):
        return scale * jax.random.normal(k, shape, dtype=jnp.float32)

    params = {
        'bn_feat_gamma': 1.0 + nrm(ks[0], (num_features,)),
        'bn_feat_beta': nrm(ks[1], (num_features,)),
        'conv_feat_w': nrm(ks[2], (num_features, hidden)),
        'conv_feat_b': nrm(ks[3], (hidden,)),
        'edge_att_w': nrm(ks[4], (2 * hidden, 2)),   # unused: dead branch in reference
        'edge_att_b': nrm(ks[5], (2,)),              # unused: dead branch in reference
        'node_att_w': nrm(ks[6], (hidden, 2)),
        'node_att_b': nrm(ks[7], (2,)),
    }
    convs = []
    for i in range(layers):
        convs.append((nrm(ks[8 + 2 * i], (hidden, hidden)),
                      nrm(ks[9 + 2 * i], (hidden,))))
    params['convs'] = convs

    k_last = jax.random.split(ks[-1], 8)
    params['fc_c_gamma'] = 1.0 + nrm(k_last[0], (hidden,))
    params['fc_c_beta'] = nrm(k_last[1], (hidden,))
    params['fc_c_w'] = nrm(k_last[2], (hidden, num_classes))
    params['fc_c_b'] = nrm(k_last[3], (num_classes,))
    params['fc_o_gamma'] = 1.0 + nrm(k_last[4], (hidden,))
    params['fc_o_beta'] = nrm(k_last[5], (hidden,))
    params['fc_o_w'] = nrm(k_last[6], (hidden, num_classes))
    params['fc_o_b'] = nrm(k_last[7], (num_classes,))
    return params


# --------------------------- main ----------------------------------------------

if __name__ == "__main__":
    num_features = 8
    hidden = 32
    num_classes = 4
    layers = 2
    num_graphs = 4
    nodes_per_graph = 8
    num_nodes = num_graphs * nodes_per_graph

    key = jax.random.PRNGKey(0)
    k_x, k_params = jax.random.split(key)

    # node features
    x = jax.random.normal(k_x, (num_nodes, num_features), dtype=jnp.float32)

    # ring graph inside each of the 4 graphs, both directions (symmetric)
    rows, cols = [], []
    for g in range(num_graphs):
        base = g * nodes_per_graph
        for i in range(nodes_per_graph):
            j = (i + 1) % nodes_per_graph
            rows += [base + i, base + j]
            cols += [base + j, base + i]
    edge_index = jnp.array([rows, cols], dtype=jnp.int32)       # [2, 64]
    batch = jnp.repeat(jnp.arange(num_graphs, dtype=jnp.int32), nodes_per_graph)

    params = init_params(k_params, num_features, hidden, num_classes, layers)

    xc_logits, xo_logits = causal_gcn_forward(params, x, edge_index, batch, num_graphs)
    jax.block_until_ready((xc_logits, xo_logits))

    assert xc_logits.shape == (num_graphs, num_classes)
    assert xo_logits.shape == (num_graphs, num_classes)
    print("KERNEL_OK")
</pallas_src>

<mosaic_0001>
module attributes {stable_mosaic.version = 11 : i64} {
  func.func @fused_causal_gcn_kernel(%arg0: memref<32x32xbf16, #tpu.memory_space<vmem>>, %arg1: memref<32x8xf32, #tpu.memory_space<vmem>>, %arg2: memref<1x8xf32, #tpu.memory_space<vmem>>, %arg3: memref<1x8xf32, #tpu.memory_space<vmem>>, %arg4: memref<8x32xf32, #tpu.memory_space<vmem>>, %arg5: memref<1x32xf32, #tpu.memory_space<vmem>>, %arg6: memref<2x32x32xf32, #tpu.memory_space<vmem>>, %arg7: memref<2x1x32xf32, #tpu.memory_space<vmem>>, %arg8: memref<32x1xf32, #tpu.memory_space<vmem>>, %arg9: memref<1x1xf32, #tpu.memory_space<vmem>>, %arg10: memref<8x32xf32, #tpu.memory_space<vmem>>, %arg11: memref<32x128xf32, #tpu.memory_space<vmem>>, %arg12: memref<32x128xf32, #tpu.memory_space<vmem>>, %arg13: memref<1x128xf32, #tpu.memory_space<vmem>>, %arg14: memref<8x128xf32, #tpu.memory_space<vmem>>) attributes {dimension_semantics = [], scalar_prefetch = 0 : i64, scratch_operands = 0 : i64, tpu.core_type = #tpu.core_type<tc>} {
    %c0 = arith.constant 0 : index
    %c0_0 = arith.constant 0 : index
    %0 = vector.load %arg0[%c0, %c0_0] : memref<32x32xbf16, #tpu.memory_space<vmem>>, vector<32x32xbf16>
    %c0_1 = arith.constant 0 : index
    %c0_2 = arith.constant 0 : index
    %1 = vector.load %arg1[%c0_1, %c0_2] : memref<32x8xf32, #tpu.memory_space<vmem>>, vector<32x8xf32>
    %c0_3 = arith.constant 0 : index
    %c0_4 = arith.constant 0 : index
    %2 = vector.load %arg2[%c0_3, %c0_4] : memref<1x8xf32, #tpu.memory_space<vmem>>, vector<1x8xf32>
    %3 = vector.broadcast %2 : vector<1x8xf32> to vector<32x8xf32>
    %4 = arith.mulf %1, %3 : vector<32x8xf32>
    %c0_5 = arith.constant 0 : index
    %c0_6 = arith.constant 0 : index
    %5 = vector.load %arg3[%c0_5, %c0_6] : memref<1x8xf32, #tpu.memory_space<vmem>>, vector<1x8xf32>
    %6 = vector.broadcast %5 : vector<1x8xf32> to vector<32x8xf32>
    %7 = arith.addf %4, %6 : vector<32x8xf32>
    %8 = arith.truncf %7 : vector<32x8xf32> to vector<32x8xbf16>
    %c0_7 = arith.constant 0 : index
    %c0_8 = arith.constant 0 : index
    %9 = vector.load %arg4[%c0_7, %c0_8] : memref<8x32xf32, #tpu.memory_space<vmem>>, vector<8x32xf32>
    %10 = arith.truncf %9 : vector<8x32xf32> to vector<8x32xbf16>
    %cst = arith.constant dense<0.000000e+00> : vector<32x32xf32>
    %11 = tpu.matmul %8, %10, %cst {dimension_numbers = #tpu.dot_dimension_numbers<[1], [0], [0], [1], [0, 0, 1, 1], [], []>} : vector<32x8xbf16>, vector<8x32xbf16>, vector<32x32xf32> -> vector<32x32xf32>
    %12 = arith.truncf %11 : vector<32x32xf32> to vector<32x32xbf16>
    %cst_9 = arith.constant dense<0.000000e+00> : vector<32x32xf32>
    %13 = tpu.matmul %0, %12, %cst_9 {dimension_numbers = #tpu.dot_dimension_numbers<[1], [0], [0], [1], [0, 0, 1, 1], [], []>} : vector<32x32xbf16>, vector<32x32xbf16>, vector<32x32xf32> -> vector<32x32xf32>
    %c0_10 = arith.constant 0 : index
    %c0_11 = arith.constant 0 : index
    %14 = vector.load %arg5[%c0_10, %c0_11] : memref<1x32xf32, #tpu.memory_space<vmem>>, vector<1x32xf32>
    %15 = vector.broadcast %14 : vector<1x32xf32> to vector<32x32xf32>
    %16 = arith.addf %13, %15 : vector<32x32xf32>
    %cst_12 = arith.constant 0.000000e+00 : f32
    %17 = vector.broadcast %cst_12 : f32 to vector<32x32xf32>
    %18 = arith.maximumf %16, %17 : vector<32x32xf32>
    %19 = arith.truncf %18 : vector<32x32xf32> to vector<32x32xbf16>
    %c0_13 = arith.constant 0 : index
    %c0_14 = arith.constant 0 : index
    %c0_15 = arith.constant 0 : index
    %20 = vector.load %arg6[%c0_13, %c0_14, %c0_15] : memref<2x32x32xf32, #tpu.memory_space<vmem>>, vector<1x32x32xf32>
    %21 = vector.shape_cast %20 : vector<1x32x32xf32> to vector<32x32xf32>
    %22 = arith.truncf %21 : vector<32x32xf32> to vector<32x32xbf16>
    %cst_16 = arith.constant dense<0.000000e+00> : vector<32x32xf32>
    %23 = tpu.matmul %19, %22, %cst_16 {dimension_numbers = #tpu.dot_dimension_numbers<[1], [0], [0], [1], [0, 0, 1, 1], [], []>} : vector<32x32xbf16>, vector<32x32xbf16>, vector<32x32xf32> -> vector<32x32xf32>
    %24 = arith.truncf %23 : vector<32x32xf32> to vector<32x32xbf16>
    %cst_17 = arith.constant dense<0.000000e+00> : vector<32x32xf32>
    %25 = tpu.matmul %0, %24, %cst_17 {dimension_numbers = #tpu.dot_dimension_numbers<[1], [0], [0], [1], [0, 0, 1, 1], [], []>} : vector<32x32xbf16>, vector<32x32xbf16>, vector<32x32xf32> -> vector<32x32xf32>
    %c0_18 = arith.constant 0 : index
    %c0_19 = arith.constant 0 : index
    %c0_20 = arith.constant 0 : index
    %26 = vector.load %arg7[%c0_18, %c0_19, %c0_20] : memref<2x1x32xf32, #tpu.memory_space<vmem>>, vector<1x1x32xf32>
    %27 = vector.shape_cast %26 : vector<1x1x32xf32> to vector<1x32xf32>
    %28 = vector.broadcast %27 : vector<1x32xf32> to vector<32x32xf32>
    %29 = arith.addf %25, %28 : vector<32x32xf32>
    %cst_21 = arith.constant 0.000000e+00 : f32
    %30 = vector.broadcast %cst_21 : f32 to vector<32x32xf32>
    %31 = arith.maximumf %29, %30 : vector<32x32xf32>
    %32 = arith.truncf %31 : vector<32x32xf32> to vector<32x32xbf16>
    %c1 = arith.constant 1 : index
    %c0_22 = arith.constant 0 : index
    %c0_23 = arith.constant 0 : index
    %33 = vector.load %arg6[%c1, %c0_22, %c0_23] : memref<2x32x32xf32, #tpu.memory_space<vmem>>, vector<1x32x32xf32>
    %34 = vector.shape_cast %33 : vector<1x32x32xf32> to vector<32x32xf32>
    %35 = arith.truncf %34 : vector<32x32xf32> to vector<32x32xbf16>
    %cst_24 = arith.constant dense<0.000000e+00> : vector<32x32xf32>
    %36 = tpu.matmul %32, %35, %cst_24 {dimension_numbers = #tpu.dot_dimension_numbers<[1], [0], [0], [1], [0, 0, 1, 1], [], []>} : vector<32x32xbf16>, vector<32x32xbf16>, vector<32x32xf32> -> vector<32x32xf32>
    %37 = arith.truncf %36 : vector<32x32xf32> to vector<32x32xbf16>
    %cst_25 = arith.constant dense<0.000000e+00> : vector<32x32xf32>
    %38 = tpu.matmul %0, %37, %cst_25 {dimension_numbers = #tpu.dot_dimension_numbers<[1], [0], [0], [1], [0, 0, 1, 1], [], []>} : vector<32x32xbf16>, vector<32x32xbf16>, vector<32x32xf32> -> vector<32x32xf32>
    %c1_26 = arith.constant 1 : index
    %c0_27 = arith.constant 0 : index
    %c0_28 = arith.constant 0 : index
    %39 = vector.load %arg7[%c1_26, %c0_27, %c0_28] : memref<2x1x32xf32, #tpu.memory_space<vmem>>, vector<1x1x32xf32>
    %40 = vector.shape_cast %39 : vector<1x1x32xf32> to vector<1x32xf32>
    %41 = vector.broadcast %40 : vector<1x32xf32> to vector<32x32xf32>
    %42 = arith.addf %38, %41 : vector<32x32xf32>
    %cst_29 = arith.constant 0.000000e+00 : f32
    %43 = vector.broadcast %cst_29 : f32 to vector<32x32xf32>
    %44 = arith.maximumf %42, %43 : vector<32x32xf32>
    %c0_30 = arith.constant 0 : index
    %c0_31 = arith.constant 0 : index
    %45 = vector.load %arg8[%c0_30, %c0_31] : memref<32x1xf32, #tpu.memory_space<vmem>>, vector<32x1xf32>
    %cst_32 = arith.constant dense<0.000000e+00> : vector<32x1xf32>
    %46 = tpu.matmul %44, %45, %cst_32 {dimension_numbers = #tpu.dot_dimension_numbers<[1], [0], [0], [1], [0, 0, 1, 1], [], []>} : vector<32x32xf32>, vector<32x1xf32>, vector<32x1xf32> -> vector<32x1xf32>
    %c0_33 = arith.constant 0 : index
    %c0_34 = arith.constant 0 : index
    %47 = vector.load %arg9[%c0_33, %c0_34] : memref<1x1xf32, #tpu.memory_space<vmem>>, vector<1x1xf32>
    %48 = vector.broadcast %47 : vector<1x1xf32> to vector<32x1xf32>
    %49 = arith.addf %46, %48 : vector<32x1xf32>
    %cst_35 = arith.constant 0.000000e+00 : f32
    %50 = vector.broadcast %cst_35 : f32 to vector<32x1xf32>
    %51 = arith.subf %50, %49 : vector<32x1xf32>
    %52 = math.exp %51 : vector<32x1xf32>
    %cst_36 = arith.constant 1.000000e+00 : f32
    %53 = vector.broadcast %cst_36 : f32 to vector<32x1xf32>
    %54 = arith.addf %53, %52 : vector<32x1xf32>
    %cst_37 = arith.constant 1.000000e+00 : f32
    %55 = vector.broadcast %cst_37 : f32 to vector<32x1xf32>
    %56 = arith.divf %55, %54 : vector<32x1xf32>
    %57 = vector.broadcast %56 : vector<32x1xf32> to vector<32x32xf32>
    %58 = arith.mulf %57, %44 : vector<32x32xf32>
    %c0_38 = arith.constant 0 : index
    %c0_39 = arith.constant 0 : index
    %59 = vector.load %arg10[%c0_38, %c0_39] : memref<8x32xf32, #tpu.memory_space<vmem>>, vector<8x32xf32>
    %60 = arith.truncf %59 : vector<8x32xf32> to vector<8x32xbf16>
    %61 = arith.truncf %44 : vector<32x32xf32> to vector<32x32xbf16>
    %cst_40 = arith.constant dense<0.000000e+00> : vector<8x32xf32>
    %62 = tpu.matmul %60, %61, %cst_40 {dimension_numbers = #tpu.dot_dimension_numbers<[1], [0], [0], [1], [0, 0, 1, 1], [], []>} : vector<8x32xbf16>, vector<32x32xbf16>, vector<8x32xf32> -> vector<8x32xf32>
    %63 = arith.truncf %58 : vector<32x32xf32> to vector<32x32xbf16>
    %cst_41 = arith.constant dense<0.000000e+00> : vector<8x32xf32>
    %64 = tpu.matmul %60, %63, %cst_41 {dimension_numbers = #tpu.dot_dimension_numbers<[1], [0], [0], [1], [0, 0, 1, 1], [], []>} : vector<8x32xbf16>, vector<32x32xbf16>, vector<8x32xf32> -> vector<8x32xf32>
    %65 = arith.subf %62, %64 : vector<8x32xf32>
    %66 = arith.truncf %64 : vector<8x32xf32> to vector<8x32xbf16>
    %c0_42 = arith.constant 0 : index
    %c0_43 = arith.constant 0 : index
    %67 = vector.load %arg11[%c0_42, %c0_43] : memref<32x128xf32, #tpu.memory_space<vmem>>, vector<32x128xf32>
    %68 = arith.truncf %67 : vector<32x128xf32> to vector<32x128xbf16>
    %cst_44 = arith.constant dense<0.000000e+00> : vector<8x128xf32>
    %69 = tpu.matmul %66, %68, %cst_44 {dimension_numbers = #tpu.dot_dimension_numbers<[1], [0], [0], [1], [0, 0, 1, 1], [], []>} : vector<8x32xbf16>, vector<32x128xbf16>, vector<8x128xf32> -> vector<8x128xf32>
    %70 = arith.truncf %65 : vector<8x32xf32> to vector<8x32xbf16>
    %c0_45 = arith.constant 0 : index
    %c0_46 = arith.constant 0 : index
    %71 = vector.load %arg12[%c0_45, %c0_46] : memref<32x128xf32, #tpu.memory_space<vmem>>, vector<32x128xf32>
    %72 = arith.truncf %71 : vector<32x128xf32> to vector<32x128xbf16>
    %cst_47 = arith.constant dense<0.000000e+00> : vector<8x128xf32>
    %73 = tpu.matmul %70, %72, %cst_47 {dimension_numbers = #tpu.dot_dimension_numbers<[1], [0], [0], [1], [0, 0, 1, 1], [], []>} : vector<8x32xbf16>, vector<32x128xbf16>, vector<8x128xf32> -> vector<8x128xf32>
    %74 = arith.addf %69, %73 : vector<8x128xf32>
    %c0_48 = arith.constant 0 : index
    %c0_49 = arith.constant 0 : index
    %75 = vector.load %arg13[%c0_48, %c0_49] : memref<1x128xf32, #tpu.memory_space<vmem>>, vector<1x128xf32>
    %76 = vector.broadcast %75 : vector<1x128xf32> to vector<8x128xf32>
    %77 = arith.addf %74, %76 : vector<8x128xf32>
    %c0_50 = arith.constant 0 : index
    %c0_51 = arith.constant 0 : index
    %78 = vector.load %arg14[%c0_50, %c0_51] : memref<8x128xf32, #tpu.memory_space<vmem>>, vector<8x128xf32>
    tpu.vector_store %arg14[%c0_50, %c0_51], %77 {strides = array<i32>} : memref<8x128xf32, #tpu.memory_space<vmem>>, vector<8x128xf32>,
    return
  }
}

</mosaic_0001>

<llo_original>
// kernel: tpu_custom_call.1
$region0: #{tpu_custom_call.1}
  #allocation0 [shape = 'u32[]', space=smem, size = 0x4, offset = 0x4, fixed_abs, tag = 'smem constant byte address 0x4 - core index']
  #allocation1 [shape = 'u32[72,128]{1,0:T(1,128)}', space=vmem, size = 0x9000, scoped, tag = 'internal scratch']
  #allocation2 [shape = 'f32[1,1]{1,0:T(1,128)S(1)}', space=vmem, size = 0x200, scoped, tag = 'scoped memory for tpu_custom_call.1']
  %s0 = inlined_call_operand.hbm [shape: bf16[32,32], index: 0, kind: input, shape index: {}]
  %s1 = inlined_call_operand.vmem [shape: f32[32,8], index: 1, kind: input, shape index: {}]
  %s2 = inlined_call_operand.hbm [shape: f32[1,8], index: 2, kind: input, shape index: {}]
  %s3 = inlined_call_operand.hbm [shape: f32[1,8], index: 3, kind: input, shape index: {}]
  %s4 = inlined_call_operand.vmem [shape: f32[8,32], index: 4, kind: input, shape index: {}]
  %s5 = inlined_call_operand.hbm [shape: f32[1,32], index: 5, kind: input, shape index: {}]
  %s6 = inlined_call_operand.vmem [shape: f32[2,32,32], index: 6, kind: input, shape index: {}]
  %s7 = inlined_call_operand.hbm [shape: f32[2,1,32], index: 7, kind: input, shape index: {}]
  %s8 = inlined_call_operand.vmem [shape: f32[32,1], index: 8, kind: input, shape index: {}]
  %s9 = inlined_call_operand.<no memory space> [shape: f32[1,1], index: 9, kind: input, shape index: {}]
  %s10 = inlined_call_operand.vmem [shape: f32[8,32], index: 10, kind: input, shape index: {}]
  %s11 = inlined_call_operand.hbm [shape: f32[32,128], index: 11, kind: input, shape index: {}]
  %s12 = inlined_call_operand.hbm [shape: f32[32,128], index: 12, kind: input, shape index: {}]
  %s13 = inlined_call_operand.vmem [shape: f32[1,128], index: 13, kind: input, shape index: {}]
  %s14 = inlined_call_operand.hbm [shape: f32[8,128], index: 14, kind: output, shape index: {}]
  %s15 = sld [smem:[#allocation0]]
  $region94: #{tpu_custom_call.1} parent=0
    _
  %s17 = ssub.s32 1, %s15
  %s18 = scalar_select 0, %s17, %s15
  %v19 = vstv %s9
  %20 = vst [vmem:[#allocation2] sm:$0x1] %v19
  $region1: #{tpu_custom_call.1} parent=0
    #allocation3 [shape = 'u8[8192]{0}', space=vmem, size = 0x2000, scoped, tag = 'input window, operand 0, single buffered']
    #allocation4 [shape = 's32[1]{0}', space=sflag, size = 0x4, scoped, tag = 'scoped memory for tpu_custom_call.1']
    #allocation5 [shape = 's32[1]{0}', space=sflag, size = 0x4, scoped, tag = 'scoped memory for tpu_custom_call.1']
    #allocation6 [shape = 'u8[512]{0}', space=vmem, size = 0x400, scoped, tag = 'input window, operand 2, single buffered']
    #allocation7 [shape = 's32[1]{0}', space=sflag, size = 0x4, scoped, tag = 'scoped memory for tpu_custom_call.1']
    #allocation8 [shape = 'u8[512]{0}', space=vmem, size = 0x400, scoped, tag = 'input window, operand 3, single buffered']
    #allocation9 [shape = 'u8[512]{0}', space=vmem, size = 0x400, scoped, tag = 'input window, operand 5, single buffered']
    #allocation10 [shape = 's32[1]{0}', space=sflag, size = 0x4, scoped, tag = 'scoped memory for tpu_custom_call.1']
    #allocation11 [shape = 'u8[1024]{0}', space=vmem, size = 0x400, scoped, tag = 'input window, operand 7, single buffered']
    #allocation12 [shape = 'u8[16384]{0}', space=vmem, size = 0x4000, scoped, tag = 'input window, operand 11, single buffered']
    #allocation13 [shape = 's32[1]{0}', space=sflag, size = 0x4, scoped, tag = 'scoped memory for tpu_custom_call.1']
    #allocation14 [shape = 'u8[16384]{0}', space=vmem, size = 0x4000, scoped, tag = 'input window, operand 12, single buffered']
    #allocation15 [shape = 'u8[4096]{0}', space=vmem, size = 0x1000, scoped, tag = 'output window, operand 0, single buffered']
    %21 = vsyncpa [#allocation4], 0
    %22 = vsyncpa [#allocation7], 0
    %23 = vsyncpa [#allocation10], 0
    %24 = vsyncpa [#allocation13], 0
    %25 = vsyncpa [#allocation5], 0
    // Predicated region
    $region2: #{tpu_custom_call.1} parent=1 // pred_check
      _
    $region3: #{tpu_custom_call.1} parent=1 // pred_check_branch
      %27 = sbr.rel (0) target = $region5
    $region4: #{tpu_custom_call.1} parent=1 // pred_region
      %29 = vsyncadd [#allocation4], 0
      %s30 = sshll.u32 %s0, 4
      %s31 = int_to_ptr.hbm [resolvable:$true] %s30
      %s32 = sshll.u32 [#allocation3], 4
      %s33 = int_to_ptr.vmem [resolvable:$true] %s32
      %38 = dma.hbm_to_vmem [thread:$0]  %s31, 256, %s33, [#allocation4], 64, 64, 4
    $region5: #{tpu_custom_call.1} parent=1 // pred_fallthru
      _
    // Predicated region
    $region6: #{tpu_custom_call.1} parent=1 // pred_check
      _
    $region7: #{tpu_custom_call.1} parent=1 // pred_check_branch
      %40 = sbr.rel (0) target = $region9
    $region8: #{tpu_custom_call.1} parent=1 // pred_region
      _
    $region9: #{tpu_custom_call.1} parent=1 // pred_fallthru
      _
    // Predicated region
    $region10: #{tpu_custom_call.1} parent=1 // pred_check
      _
    $region11: #{tpu_custom_call.1} parent=1 // pred_check_branch
      %42 = sbr.rel (0) target = $region13
    $region12: #{tpu_custom_call.1} parent=1 // pred_region
      %44 = vsyncadd [#allocation7], 0
      %s46 = sshll.u32 %s2, 4
      %s47 = int_to_ptr.hbm [resolvable:$true] %s46
      %s48 = sshll.u32 [#allocation6], 4
      %s49 = int_to_ptr.vmem [resolvable:$true] %s48
      %51 = dma.hbm_to_vmem [thread:$0]  %s47, 16, %s49, [#allocation7]
    $region13: #{tpu_custom_call.1} parent=1 // pred_fallthru
      _
    // Predicated region
    $region14: #{tpu_custom_call.1} parent=1 // pred_check
      _
    $region15: #{tpu_custom_call.1} parent=1 // pred_check_branch
      %53 = sbr.rel (0) target = $region17
    $region16: #{tpu_custom_call.1} parent=1 // pred_region
      %55 = vsyncadd [#allocation7], 0
      %s57 = sshll.u32 %s3, 4
      %s58 = int_to_ptr.hbm [resolvable:$true] %s57
      %s59 = sshll.u32 [#allocation8], 4
      %s60 = int_to_ptr.vmem [resolvable:$true] %s59
      %62 = dma.hbm_to_vmem [thread:$0]  %s58, 16, %s60, [#allocation7]
    $region17: #{tpu_custom_call.1} parent=1 // pred_fallthru
      _
    // Predicated region
    $region18: #{tpu_custom_call.1} parent=1 // pred_check
      _
    $region19: #{tpu_custom_call.1} parent=1 // pred_check_branch
      %64 = sbr.rel (0) target = $region21
    $region20: #{tpu_custom_call.1} parent=1 // pred_region
      _
    $region21: #{tpu_custom_call.1} parent=1 // pred_fallthru
      _
    // Predicated region
    $region22: #{tpu_custom_call.1} parent=1 // pred_check
      _
    $region23: #{tpu_custom_call.1} parent=1 // pred_check_branch
      %66 = sbr.rel (0) target = $region25
    $region24: #{tpu_custom_call.1} parent=1 // pred_region
      %68 = vsyncadd [#allocation10], 0
      %s70 = sshll.u32 %s5, 4
      %s71 = int_to_ptr.hbm [resolvable:$true] %s70
      %s72 = sshll.u32 [#allocation9], 4
      %s73 = int_to_ptr.vmem [resolvable:$true] %s72
      %75 = dma.hbm_to_vmem [thread:$0]  %s71, 16, %s73, [#allocation10]
    $region25: #{tpu_custom_call.1} parent=1 // pred_fallthru
      _
    // Predicated region
    $region26: #{tpu_custom_call.1} parent=1 // pred_check
      _
    $region27: #{tpu_custom_call.1} parent=1 // pred_check_branch
      %77 = sbr.rel (0) target = $region29
    $region28: #{tpu_custom_call.1} parent=1 // pred_region
      _
    $region29: #{tpu_custom_call.1} parent=1 // pred_fallthru
      _
    // Predicated region
    $region30: #{tpu_custom_call.1} parent=1 // pred_check
      _
    $region31: #{tpu_custom_call.1} parent=1 // pred_check_branch
      %79 = sbr.rel (0) target = $region33
    $region32: #{tpu_custom_call.1} parent=1 // pred_region
      %81 = vsyncadd [#allocation10], 0
      %s82 = sshll.u32 %s7, 4
      %s83 = int_to_ptr.hbm [resolvable:$true] %s82
      %s84 = sshll.u32 [#allocation11], 4
      %s85 = int_to_ptr.vmem [resolvable:$true] %s84
      %90 = dma.hbm_to_vmem [thread:$0]  %s83, 32, %s85, [#allocation10], 16, 16, 1
    $region33: #{tpu_custom_call.1} parent=1 // pred_fallthru
      _
    // Predicated region
    $region34: #{tpu_custom_call.1} parent=1 // pred_check
      _
    $region35: #{tpu_custom_call.1} parent=1 // pred_check_branch
      %92 = sbr.rel (0) target = $region37
    $region36: #{tpu_custom_call.1} parent=1 // pred_region
      _
    $region37: #{tpu_custom_call.1} parent=1 // pred_fallthru
      _
    // Predicated region
    $region38: #{tpu_custom_call.1} parent=1 // pred_check
      _
    $region39: #{tpu_custom_call.1} parent=1 // pred_check_branch
      %94 = sbr.rel (0) target = $region41
    $region40: #{tpu_custom_call.1} parent=1 // pred_region
      _
    $region41: #{tpu_custom_call.1} parent=1 // pred_fallthru
      _
    // Predicated region
    $region42: #{tpu_custom_call.1} parent=1 // pred_check
      _
    $region43: #{tpu_custom_call.1} parent=1 // pred_check_branch
      %96 = sbr.rel (0) target = $region45
    $region44: #{tpu_custom_call.1} parent=1 // pred_region
      _
    $region45: #{tpu_custom_call.1} parent=1 // pred_fallthru
      _
    // Predicated region
    $region46: #{tpu_custom_call.1} parent=1 // pred_check
      _
    $region47: #{tpu_custom_call.1} parent=1 // pred_check_branch
      %98 = sbr.rel (0) target = $region49
    $region48: #{tpu_custom_call.1} parent=1 // pred_region
      %100 = vsyncadd [#allocation13], 0
      %s101 = sshll.u32 %s11, 4
      %s102 = int_to_ptr.hbm [resolvable:$true] %s101
      %s103 = sshll.u32 [#allocation12], 4
      %s104 = int_to_ptr.vmem [resolvable:$true] %s103
      %109 = dma.hbm_to_vmem [thread:$0]  %s102, 512, %s104, [#allocation13], 128, 128, 8
    $region49: #{tpu_custom_call.1} parent=1 // pred_fallthru
      _
    // Predicated region
    $region50: #{tpu_custom_call.1} parent=1 // pred_check
      _
    $region51: #{tpu_custom_call.1} parent=1 // pred_check_branch
      %111 = sbr.rel (0) target = $region53
    $region52: #{tpu_custom_call.1} parent=1 // pred_region
      %113 = vsyncadd [#allocation13], 0
      %s114 = sshll.u32 %s12, 4
      %s115 = int_to_ptr.hbm [resolvable:$true] %s114
      %s116 = sshll.u32 [#allocation14], 4
      %s117 = int_to_ptr.vmem [resolvable:$true] %s116
      %122 = dma.hbm_to_vmem [thread:$0]  %s115, 512, %s117, [#allocation13], 128, 128, 8
    $region53: #{tpu_custom_call.1} parent=1 // pred_fallthru
      _
    // Predicated region
    $region54: #{tpu_custom_call.1} parent=1 // pred_check
      _
    $region55: #{tpu_custom_call.1} parent=1 // pred_check_branch
      %124 = sbr.rel (0) target = $region57
    $region56: #{tpu_custom_call.1} parent=1 // pred_region
      _
    $region57: #{tpu_custom_call.1} parent=1 // pred_fallthru
      _
    // Predicated region
    $region58: #{tpu_custom_call.1} parent=1 // pred_check
      _
    $region59: #{tpu_custom_call.1} parent=1 // pred_check_branch
      %126 = sbr.rel (0) target = $region61
    $region60: #{tpu_custom_call.1} parent=1 // pred_region
      %128 = dma.done [#allocation4], 256
    $region61: #{tpu_custom_call.1} parent=1 // pred_fallthru
      _
    // Predicated region
    $region62: #{tpu_custom_call.1} parent=1 // pred_check
      _
    $region63: #{tpu_custom_call.1} parent=1 // pred_check_branch
      %130 = sbr.rel (0) target = $region65
    $region64: #{tpu_custom_call.1} parent=1 // pred_region
      %132 = dma.done [#allocation7], 16
    $region65: #{tpu_custom_call.1} parent=1 // pred_fallthru
      _
    // Predicated region
    $region66: #{tpu_custom_call.1} parent=1 // pred_check
      _
    $region67: #{tpu_custom_call.1} parent=1 // pred_check_branch
      %134 = sbr.rel (0) target = $region69
    $region68: #{tpu_custom_call.1} parent=1 // pred_region
      %136 = dma.done [#allocation7], 16
    $region69: #{tpu_custom_call.1} parent=1 // pred_fallthru
      _
    // Predicated region
    $region70: #{tpu_custom_call.1} parent=1 // pred_check
      _
    $region71: #{tpu_custom_call.1} parent=1 // pred_check_branch
      %138 = sbr.rel (0) target = $region73
    $region72: #{tpu_custom_call.1} parent=1 // pred_region
      %140 = dma.done [#allocation10], 16
    $region73: #{tpu_custom_call.1} parent=1 // pred_fallthru
      _
    // Predicated region
    $region74: #{tpu_custom_call.1} parent=1 // pred_check
      _
    $region75: #{tpu_custom_call.1} parent=1 // pred_check_branch
      %142 = sbr.rel (0) target = $region77
    $region76: #{tpu_custom_call.1} parent=1 // pred_region
      %144 = dma.done [#allocation10], 32
    $region77: #{tpu_custom_call.1} parent=1 // pred_fallthru
      _
    // Predicated region
    $region78: #{tpu_custom_call.1} parent=1 // pred_check
      _
    $region79: #{tpu_custom_call.1} parent=1 // pred_check_branch
      %146 = sbr.rel (0) target = $region81
    $region80: #{tpu_custom_call.1} parent=1 // pred_region
      %148 = dma.done [#allocation13], 512
    $region81: #{tpu_custom_call.1} parent=1 // pred_fallthru
      _
    // Predicated region
    $region82: #{tpu_custom_call.1} parent=1 // pred_check
      _
    $region83: #{tpu_custom_call.1} parent=1 // pred_check_branch
      %150 = sbr.rel (0) target = $region85
    $region84: #{tpu_custom_call.1} parent=1 // pred_region
      %152 = dma.done [#allocation13], 512
    $region85: #{tpu_custom_call.1} parent=1 // pred_fallthru
      _
    %v154 = vld [vmem:[#allocation3] sm:$0xf]
    %v155 = vld [vmem:[#allocation3 + $0x4] sm:$0xf]
    %v156 = vld [vmem:[#allocation3 + $0x8] sm:$0xf]
    %v157 = vld [vmem:[#allocation3 + $0xc] sm:$0xf]
    %v158 = vld [vmem:[%s1] sm:$0xff]
    %v159 = vld [vmem:[%s1 + $0x8] sm:$0xff]
    %v160 = vld [vmem:[%s1 + $0x10] sm:$0xff]
    %v161 = vld [vmem:[%s1 + $0x18] sm:$0xff]
    %v162 = vld [vmem:[#allocation6] sm:$0x1]
    %v164 = vperm.slane %v162, 0
    %v166 = vmul.f32 %v158, %v164
    %v167 = vmul.f32 %v159, %v164
    %v168 = vmul.f32 %v160, %v164
    %v169 = vmul.f32 %v161, %v164
    %v170 = vld [vmem:[#allocation8] sm:$0x1]
    %v172 = vperm.slane %v170, 0
    %v174 = vadd.f32 %v166, %v172
    %v175 = vadd.f32 %v167, %v172
    %v176 = vadd.f32 %v168, %v172
    %v177 = vadd.f32 %v169, %v172
    %v178 = vpack.c.bf16 %v175, %v174
    %v179 = vpack.c.bf16 %v177, %v176
    %v180 = vld [vmem:[%s4] sm:$0xff]
    %v181 = vpack.c.bf16 %v180, %v180
    %vm182 = vcmask 64512
    %v184 = vsel %vm182, %v178, 0
    %v187 = vsel %vm182, %v179, 0
    %vm189 = vcmask 1043456
    %v191 = vsel %vm189, %v181, 0
    %193 = vmatpush.bf16.msra.mxu0 0
    %194 = vmatpush.bf16.msra.mxu0 0
    %195 = vmatpush.bf16.msra.mxu0 0
    %196 = vmatpush.bf16.msra.mxu0 0
    %197 = vmatpush.bf16.msra.mxu0 0
    %198 = vmatpush.bf16.msra.mxu0 0
    %199 = vmatpush.bf16.msra.mxu0 0
    %200 = vmatpush.bf16.msra.mxu0 %v191
    %201 = vmatmul.bf16.gmra.mxu0 %v184
    %v202 = vpop.f32.mrf.mxu0
    %v203 = vadd.f32 0.0, %v202
    %v204 = vpop.f32.mrf.mxu0
    %v205 = vadd.f32 0.0, %v204
    %206 = vmatmul.bf16.gmra.mxu0 %v187
    %v207 = vpop.f32.mrf.mxu0
    %v208 = vadd.f32 0.0, %v207
    %v209 = vpop.f32.mrf.mxu0
    %v210 = vadd.f32 0.0, %v209
    %211 = vdwg.mxu0
    %v212 = vpack.c.bf16 %v205, %v203
    %v213 = vpack.c.bf16 %v210, %v208
    %v214 = vld [vmem:[#allocation9] sm:$0x1]
    %v216 = vperm.slane %v214, 0
    %v222 = vunpack.c.l.b16 %v154
    %v223 = vunpack.c.l.b16 %v155
    %v224 = vunpack.c.l.b16 %v156
    %v225 = vunpack.c.l.b16 %v157
    %v226 = vpack.c.b16 %v223, %v222
    %v227 = vpack.c.b16 %v225, %v224
    %vm228 = vcmask 261120
    %v230 = vsel %vm228, %v226, 0
    %v233 = vsel %vm228, %v227, 0
    %235 = vmatpush.bf16.msra.mxu0 0
    %236 = vmatpush.bf16.msra.mxu0 0
    %237 = vmatpush.bf16.msra.mxu0 0
    %238 = vmatpush.bf16.msra.mxu0 0
    %239 = vmatpush.bf16.msra.mxu0 0
    %240 = vmatpush.bf16.msra.mxu0 0
    %241 = vmatpush.bf16.msra.mxu0 %v213
    %242 = vmatpush.bf16.msra.mxu0 %v212
    %243 = vmatmul.bf16.gmra.mxu0 %v230
    %v244 = vpop.f32.mrf.mxu0
    %v245 = vadd.f32 %v216, %v244
    %v246 = vpop.f32.mrf.mxu0
    %v247 = vadd.f32 %v216, %v246
    %248 = vmatmul.bf16.gmra.mxu0 %v233
    %v249 = vpop.f32.mrf.mxu0
    %v250 = vadd.f32 %v216, %v249
    %v251 = vpop.f32.mrf.mxu0
    %v252 = vadd.f32 %v216, %v251
    %253 = vdwg.mxu0
    %v254 = vmax.f32 %v245, 0.0
    %v255 = vmax.f32 %v247, 0.0
    %v256 = vmax.f32 %v250, 0.0
    %v257 = vmax.f32 %v252, 0.0
    %v258 = vpack.c.bf16 %v255, %v254
    %v259 = vpack.c.bf16 %v257, %v256
    %v260 = vld [vmem:[%s6] sm:$0xff]
    %v261 = vld [vmem:[%s6 + $0x8] sm:$0xff]
    %v262 = vld [vmem:[%s6 + $0x10] sm:$0xff]
    %v263 = vld [vmem:[%s6 + $0x18] sm:$0xff]
    %v264 = vpack.c.bf16 %v261, %v260
    %v265 = vpack.c.bf16 %v263, %v262
    %v267 = vsel %vm228, %v258, 0
    %v270 = vsel %vm228, %v259, 0
    %272 = vmatpush.bf16.msra.mxu0 0
    %273 = vmatpush.bf16.msra.mxu0 0
    %274 = vmatpush.bf16.msra.mxu0 0
    %275 = vmatpush.bf16.msra.mxu0 0
    %276 = vmatpush.bf16.msra.mxu0 0
    %277 = vmatpush.bf16.msra.mxu0 0
    %278 = vmatpush.bf16.msra.mxu0 %v265
    %279 = vmatpush.bf16.msra.mxu0 %v264
    %280 = vmatmul.bf16.gmra.mxu0 %v267
    %v281 = vpop.f32.mrf.mxu0
    %v282 = vadd.f32 0.0, %v281
    %v283 = vpop.f32.mrf.mxu0
    %v284 = vadd.f32 0.0, %v283
    %285 = vmatmul.bf16.gmra.mxu0 %v270
    %v286 = vpop.f32.mrf.mxu0
    %v287 = vadd.f32 0.0, %v286
    %v288 = vpop.f32.mrf.mxu0
    %v289 = vadd.f32 0.0, %v288
    %290 = vdwg.mxu0
    %v291 = vpack.c.bf16 %v284, %v282
    %v292 = vpack.c.bf16 %v289, %v287
    %v293 = vld [vmem:[#allocation11] sm:$0x1]
    %v295 = vperm.slane %v293, 0
    %297 = vmatpush.bf16.msra.mxu0 0
    %298 = vmatpush.bf16.msra.mxu0 0
    %299 = vmatpush.bf16.msra.mxu0 0
    %300 = vmatpush.bf16.msra.mxu0 0
    %301 = vmatpush.bf16.msra.mxu0 0
    %302 = vmatpush.bf16.msra.mxu0 0
    %303 = vmatpush.bf16.msra.mxu0 %v292
    %304 = vmatpush.bf16.msra.mxu0 %v291
    %305 = vmatmul.bf16.gmra.mxu0 %v230
    %v306 = vpop.f32.mrf.mxu0
    %v307 = vadd.f32 %v295, %v306
    %v308 = vpop.f32.mrf.mxu0
    %v309 = vadd.f32 %v295, %v308
    %310 = vmatmul.bf16.gmra.mxu0 %v233
    %v311 = vpop.f32.mrf.mxu0
    %v312 = vadd.f32 %v295, %v311
    %v313 = vpop.f32.mrf.mxu0
    %v314 = vadd.f32 %v295, %v313
    %315 = vdwg.mxu0
    %v316 = vmax.f32 %v307, 0.0
    %v317 = vmax.f32 %v309, 0.0
    %v318 = vmax.f32 %v312, 0.0
    %v319 = vmax.f32 %v314, 0.0
    %v320 = vpack.c.bf16 %v317, %v316
    %v321 = vpack.c.bf16 %v319, %v318
    %s322 = scalar_lea.vmem %s6, 32
    %v323 = vld [vmem:[%s322] sm:$0xff]
    %v324 = vld [vmem:[%s322 + $0x8] sm:$0xff]
    %v325 = vld [vmem:[%s322 + $0x10] sm:$0xff]
    %v326 = vld [vmem:[%s322 + $0x18] sm:$0xff]
    %v327 = vpack.c.bf16 %v324, %v323
    %v328 = vpack.c.bf16 %v326, %v325
    %v330 = vsel %vm228, %v320, 0
    %v333 = vsel %vm228, %v321, 0
    %335 = vmatpush.bf16.msra.mxu0 0
    %336 = vmatpush.bf16.msra.mxu0 0
    %337 = vmatpush.bf16.msra.mxu0 0
    %338 = vmatpush.bf16.msra.mxu0 0
    %339 = vmatpush.bf16.msra.mxu0 0
    %340 = vmatpush.bf16.msra.mxu0 0
    %341 = vmatpush.bf16.msra.mxu0 %v328
    %342 = vmatpush.bf16.msra.mxu0 %v327
    %343 = vmatmul.bf16.gmra.mxu0 %v330
    %v344 = vpop.f32.mrf.mxu0
    %v345 = vadd.f32 0.0, %v344
    %v346 = vpop.f32.mrf.mxu0
    %v347 = vadd.f32 0.0, %v346
    %348 = vmatmul.bf16.gmra.mxu0 %v333
    %v349 = vpop.f32.mrf.mxu0
    %v350 = vadd.f32 0.0, %v349
    %v351 = vpop.f32.mrf.mxu0
    %v352 = vadd.f32 0.0, %v351
    %353 = vdwg.mxu0
    %v354 = vpack.c.bf16 %v347, %v345
    %v355 = vpack.c.bf16 %v352, %v350
    %s356 = scalar_lea.vmem [#allocation11], 1
    %v357 = vld [vmem:[%s356] sm:$0x1]
    %v359 = vperm.slane %v357, 0
    %361 = vmatpush.bf16.msra.mxu0 0
    %362 = vmatpush.bf16.msra.mxu0 0
    %363 = vmatpush.bf16.msra.mxu0 0
    %364 = vmatpush.bf16.msra.mxu0 0
    %365 = vmatpush.bf16.msra.mxu0 0
    %366 = vmatpush.bf16.msra.mxu0 0
    %367 = vmatpush.bf16.msra.mxu0 %v355
    %368 = vmatpush.bf16.msra.mxu0 %v354
    %369 = vmatmul.bf16.gmra.mxu0 %v230
    %v370 = vpop.f32.mrf.mxu0
    %v371 = vadd.f32 %v359, %v370
    %v372 = vpop.f32.mrf.mxu0
    %v373 = vadd.f32 %v359, %v372
    %374 = vmatmul.bf16.gmra.mxu0 %v233
    %v375 = vpop.f32.mrf.mxu0
    %v376 = vadd.f32 %v359, %v375
    %v377 = vpop.f32.mrf.mxu0
    %v378 = vadd.f32 %v359, %v377
    %379 = vdwg.mxu0
    %v380 = vmax.f32 %v371, 0.0
    %v381 = vmax.f32 %v373, 0.0
    %v382 = vmax.f32 %v376, 0.0
    %v383 = vmax.f32 %v378, 0.0
    %v384 = vld [vmem:[%s8] sm:$0xff]
    %v385 = vld [vmem:[%s8 + $0x8] sm:$0xff]
    %v386 = vld [vmem:[%s8 + $0x10] sm:$0xff]
    %v387 = vld [vmem:[%s8 + $0x18] sm:$0xff]
    %v388 = vld [vmem:[#allocation2] sm:$0x1]
    %v390 = vperm.slane %v388, 0
    %v393 = vsel %vm228, %v380, 0
    %v396 = vsel %vm228, %v381, 0
    %v399 = vsel %vm228, %v382, 0
    %v402 = vsel %vm228, %v383, 0
    %404 = vmatpush.msra.mxu0 0.0
    %405 = vmatpush.msra.mxu0 0.0
    %406 = vmatpush.msra.mxu0 0.0
    %407 = vmatpush.msra.mxu0 0.0
    %408 = vmatpush.msra.mxu0 0.0
    %409 = vmatpush.msra.mxu0 0.0
    %410 = vmatpush.msra.mxu0 0.0
    %411 = vmatpush.msra.mxu0 0.0
    %412 = vmatpush.msra.mxu0 0.0
    %413 = vmatpush.msra.mxu0 0.0
    %414 = vmatpush.msra.mxu0 0.0
    %415 = vmatpush.msra.mxu0 0.0
    %416 = vmatpush.msra.mxu0 %v387
    %417 = vmatpush.msra.mxu0 %v386
    %418 = vmatpush.msra.mxu0 %v385
    %419 = vmatpush.msra.mxu0 %v384
    %420 = vmatmul.f32.gmra.mxu0 %v393
    %v421 = vpop.f32.mrf.mxu0
    %v422 = vadd.f32 %v390, %v421
    %423 = vmatmul.f32.gmra.mxu0 %v396
    %v424 = vpop.f32.mrf.mxu0
    %v425 = vadd.f32 %v390, %v424
    %426 = vmatmul.f32.gmra.mxu0 %v399
    %v427 = vpop.f32.mrf.mxu0
    %v428 = vadd.f32 %v390, %v427
    %429 = vmatmul.f32.gmra.mxu0 %v402
    %v430 = vpop.f32.mrf.mxu0
    %v431 = vadd.f32 %v390, %v430
    %432 = vdwg.mxu0
    %v433 = vsub.f32 0.0, %v422
    %v434 = vsub.f32 0.0, %v425
    %v435 = vsub.f32 0.0, %v428
    %v436 = vsub.f32 0.0, %v431
    %v437 = vmul.f32 %v433, 1.442695
    %v438 = vpow.pop %v437
    %v439 = vmul.f32 %v434, 1.442695
    %v440 = vpow.pop %v439
    %v441 = vmul.f32 %v435, 1.442695
    %v442 = vpow.pop %v441
    %v443 = vmul.f32 %v436, 1.442695
    %v444 = vpow.pop %v443
    %v445 = vadd.f32 %v438, 1.0
    %v446 = vadd.f32 %v440, 1.0
    %v447 = vadd.f32 %v442, 1.0
    %v448 = vadd.f32 %v444, 1.0
    %v449 = vrcp.pop %v445
    %v450 = vmul.f32 %v445, %v449
    %v451 = vsub.f32 1.0, %v450
    %v452 = vmul.f32 %v449, %v451
    %v453 = vadd.f32 %v449, %v452
    %vm454 = vweird.f32 %v445
    %vm455 = vweird.f32 %v449
    %vm456 = vmor %vm454, %vm455
    %v457 = vsel %vm456, %v449, %v453
    %v458 = vand.u32 2147483647, %v445
    %vm459 = vcmp.eq.f32.partialorder %v458, 8.507059e+37
    %v460 = vand.u32 %v445, 2147483648
    %v461 = vor.u32 1.1754944e-38, %v460
    %v462 = vsel %vm459, %v461, %v457
    %v463 = vmul.f32 1.0, %v462
    %v464 = vrcp.pop %v446
    %v465 = vmul.f32 %v446, %v464
    %v466 = vsub.f32 1.0, %v465
    %v467 = vmul.f32 %v464, %v466
    %v468 = vadd.f32 %v464, %v467
    %vm469 = vweird.f32 %v446
    %vm470 = vweird.f32 %v464
    %vm471 = vmor %vm469, %vm470
    %v472 = vsel %vm471, %v464, %v468
    %v473 = vand.u32 2147483647, %v446
    %vm474 = vcmp.eq.f32.partialorder %v473, 8.507059e+37
    %v475 = vand.u32 %v446, 2147483648
    %v476 = vor.u32 1.1754944e-38, %v475
    %v477 = vsel %vm474, %v476, %v472
    %v478 = vmul.f32 1.0, %v477
    %v479 = vrcp.pop %v447
    %v480 = vmul.f32 %v447, %v479
    %v481 = vsub.f32 1.0, %v480
    %v482 = vmul.f32 %v479, %v481
    %v483 = vadd.f32 %v479, %v482
    %vm484 = vweird.f32 %v447
    %vm485 = vweird.f32 %v479
    %vm486 = vmor %vm484, %vm485
    %v487 = vsel %vm486, %v479, %v483
    %v488 = vand.u32 2147483647, %v447
    %vm489 = vcmp.eq.f32.partialorder %v488, 8.507059e+37
    %v490 = vand.u32 %v447, 2147483648
    %v491 = vor.u32 1.1754944e-38, %v490
    %v492 = vsel %vm489, %v491, %v487
    %v493 = vmul.f32 1.0, %v492
    %v494 = vrcp.pop %v448
    %v495 = vmul.f32 %v448, %v494
    %v496 = vsub.f32 1.0, %v495
    %v497 = vmul.f32 %v494, %v496
    %v498 = vadd.f32 %v494, %v497
    %vm499 = vweird.f32 %v448
    %vm500 = vweird.f32 %v494
    %vm501 = vmor %vm499, %vm500
    %v502 = vsel %vm501, %v494, %v498
    %v503 = vand.u32 2147483647, %v448
    %vm504 = vcmp.eq.f32.partialorder %v503, 8.507059e+37
    %v505 = vand.u32 %v448, 2147483648
    %v506 = vor.u32 1.1754944e-38, %v505
    %v507 = vsel %vm504, %v506, %v502
    %v508 = vmul.f32 1.0, %v507
    %510 = vset.pattern.permute.xlu0 0
    %511 = vperm.xlu0 %510, %v463
    %v512 = vpop.permute.xlu0 %511
    %515 = vset.pattern.permute.xlu0 0
    %516 = vperm.xlu0 %515, %v478
    %v517 = vpop.permute.xlu0 %516
    %520 = vset.pattern.permute.xlu0 0
    %521 = vperm.xlu0 %520, %v493
    %v522 = vpop.permute.xlu0 %521
    %525 = vset.pattern.permute.xlu0 0
    %526 = vperm.xlu0 %525, %v508
    %v527 = vpop.permute.xlu0 %526
    %v529 = vmul.f32 %v512, %v380
    %v530 = vmul.f32 %v517, %v381
    %v531 = vmul.f32 %v522, %v382
    %v532 = vmul.f32 %v527, %v383
    %v533 = vld [vmem:[%s10] sm:$0xff]
    %v534 = vpack.c.bf16 %v533, %v533
    %v535 = vpack.c.bf16 %v381, %v380
    %v536 = vpack.c.bf16 %v383, %v382
    %v538 = vsel %vm228, %v534, 0
    %540 = vmatpush.bf16.msra.mxu0 0
    %541 = vmatpush.bf16.msra.mxu0 0
    %542 = vmatpush.bf16.msra.mxu0 0
    %543 = vmatpush.bf16.msra.mxu0 0
    %544 = vmatpush.bf16.msra.mxu0 0
    %545 = vmatpush.bf16.msra.mxu0 0
    %546 = vmatpush.bf16.msra.mxu0 %v536
    %547 = vmatpush.bf16.msra.mxu0 %v535
    %548 = vmatmul.bf16.gmra.mxu0 %v538
    %v549 = vpop.f32.mrf.mxu0
    %v550 = vadd.f32 0.0, %v549
    %v551 = vpop.f32.mrf.mxu0
    %552 = vdwg.mxu0
    %v553 = vpack.c.bf16 %v530, %v529
    %v554 = vpack.c.bf16 %v532, %v531
    %555 = vmatpush.bf16.msra.mxu0 0
    %556 = vmatpush.bf16.msra.mxu0 0
    %557 = vmatpush.bf16.msra.mxu0 0
    %558 = vmatpush.bf16.msra.mxu0 0
    %559 = vmatpush.bf16.msra.mxu0 0
    %560 = vmatpush.bf16.msra.mxu0 0
    %561 = vmatpush.bf16.msra.mxu0 %v554
    %562 = vmatpush.bf16.msra.mxu0 %v553
    %563 = vmatmul.bf16.gmra.mxu0 %v538
    %v564 = vpop.f32.mrf.mxu0
    %v565 = vadd.f32 0.0, %v564
    %v566 = vpop.f32.mrf.mxu0
    %567 = vdwg.mxu0
    %v568 = vsub.f32 %v550, %v565
    %v569 = vpack.c.bf16 %v565, %v565
    %v570 = vld [vmem:[#allocation12] sm:$0xff]
    %v571 = vld [vmem:[#allocation12 + $0x8] sm:$0xff]
    %v572 = vld [vmem:[#allocation12 + $0x10] sm:$0xff]
    %v573 = vld [vmem:[#allocation12 + $0x18] sm:$0xff]
    %v574 = vpack.c.bf16 %v571, %v570
    %v575 = vpack.c.bf16 %v573, %v572
    %v576 = vpack.c.bf16 %v568, %v568
    %v577 = vld [vmem:[#allocation14] sm:$0xff]
    %v578 = vld [vmem:[#allocation14 + $0x8] sm:$0xff]
    %v579 = vld [vmem:[#allocation14 + $0x10] sm:$0xff]
    %v580 = vld [vmem:[#allocation14 + $0x18] sm:$0xff]
    %v581 = vpack.c.bf16 %v578, %v577
    %v582 = vpack.c.bf16 %v580, %v579
    %v584 = vsel %vm228, %v576, 0
    %586 = vmatpush.bf16.msra.mxu0 0
    %587 = vmatpush.bf16.msra.mxu0 0
    %588 = vmatpush.bf16.msra.mxu0 0
    %589 = vmatpush.bf16.msra.mxu0 0
    %590 = vmatpush.bf16.msra.mxu0 0
    %591 = vmatpush.bf16.msra.mxu0 0
    %592 = vmatpush.bf16.msra.mxu0 %v582
    %593 = vmatpush.bf16.msra.mxu0 %v581
    %594 = vmatmul.bf16.gmra.mxu0 %v584
    %v595 = vpop.f32.mrf.mxu0
    %v596 = vadd.f32 0.0, %v595
    %v597 = vpop.f32.mrf.mxu0
    %598 = vdwg.mxu0
    %v600 = vsel %vm228, %v569, 0
    %602 = vmatpush.bf16.msra.mxu0 0
    %603 = vmatpush.bf16.msra.mxu0 0
    %604 = vmatpush.bf16.msra.mxu0 0
    %605 = vmatpush.bf16.msra.mxu0 0
    %606 = vmatpush.bf16.msra.mxu0 0
    %607 = vmatpush.bf16.msra.mxu0 0
    %608 = vmatpush.bf16.msra.mxu0 %v575
    %609 = vmatpush.bf16.msra.mxu0 %v574
    %610 = vmatmul.bf16.gmra.mxu0 %v600
    %v611 = vpop.f32.mrf.mxu0
    %v612 = vadd.f32 %v596, %v611
    %v613 = vpop.f32.mrf.mxu0
    %614 = vdwg.mxu0
    %v615 = vld [vmem:[%s13] sm:$0x1]
    %v617 = vperm.slane %v615, 0
    %v619 = vadd.f32 %v612, %v617
    %620 = vst [vmem:[#allocation15] sm:$0xff] %v619
    // Predicated region
    $region86: #{tpu_custom_call.1} parent=1 // pred_check
      _
    $region87: #{tpu_custom_call.1} parent=1 // pred_check_branch
      %622 = sbr.rel (0) target = $region89
    $region88: #{tpu_custom_call.1} parent=1 // pred_region
      %624 = vsyncadd [#allocation5], 0
      %s626 = sshll.u32 [#allocation15], 4
      %s627 = int_to_ptr.vmem [resolvable:$true] %s626
      %s628 = sshll.u32 %s14, 4
      %s629 = int_to_ptr.hbm [resolvable:$true] %s628
      %631 = dma.vmem_to_hbm [thread:$0]  %s627, 128, %s629, [#allocation5]
    $region89: #{tpu_custom_call.1} parent=1 // pred_fallthru
      _
    // Predicated region
    $region90: #{tpu_custom_call.1} parent=1 // pred_check
      _
    $region91: #{tpu_custom_call.1} parent=1 // pred_check_branch
      %633 = sbr.rel (0) target = $region93
    $region92: #{tpu_custom_call.1} parent=1 // pred_region
      %635 = dma.done [#allocation5], 128
    $region93: #{tpu_custom_call.1} parent=1 // pred_fallthru
      _
    %636 = vsyncpa [#allocation4], 1
    %637 = vsyncpa [#allocation7], 1
    %638 = vsyncpa [#allocation10], 1
    %639 = vsyncpa [#allocation13], 1
    %640 = vsyncpa [#allocation5], 1

</llo_original>
